<compile_context>
chip_gen: v7x
topology: tpu7x:2x2x1
jax: 0.10.0
libtpu: 0.0.40
codegen_flags: <defaults>
</compile_context>

<pallas_src>
import jax
import jax.numpy as jnp
from jax.experimental import pallas as pl
from jax.experimental.pallas import tpu as pltpu


def _gelu_tanh(x):
    # PyTorch "gelu_pytorch_tanh" / Gemma hidden_act: tanh-approximate GELU.
    c = jnp.sqrt(2.0 / jnp.pi).astype(x.dtype)
    return 0.5 * x * (1.0 + jnp.tanh(c * (x + 0.044715 * x * x * x)))


# ---------------------------------------------------------------------------
# Kernels
# ---------------------------------------------------------------------------

def _gemma_mlp_kernel_acc(x_ref, wgu_ref, wd_ref, o_ref, acc_ref):
    # Multi-step intermediate axis (grid axis 1, "arbitrary", last):
    # accumulate down-proj partial products in an f32 VMEM scratch.
    #   x_ref  : (tm, H)      resident token tile
    #   wgu_ref: (H, 2*ti)    fused [gate | up] column tile (single DMA stream)
    #   wd_ref : (ti, H)      down-proj row tile
    #   o_ref  : (tm, H)      output tile (written on last k step)
    #   acc_ref: (tm, H)      f32 accumulator scratch
    k = pl.program_id(1)

    @pl.when(k == 0)
    def _init():
        acc_ref[...] = jnp.zeros_like(acc_ref)

    x = x_ref[...]
    gu = jnp.dot(x, wgu_ref[...], preferred_element_type=jnp.float32)   # (tm, 2*ti)
    ti = gu.shape[1] // 2
    h = _gelu_tanh(gu[:, :ti]) * gu[:, ti:]                             # tanh -> EUP
    acc_ref[...] += jnp.dot(h.astype(wd_ref.dtype), wd_ref[...],
                            preferred_element_type=jnp.float32)

    @pl.when(k == pl.num_programs(1) - 1)
    def _finalize():
        o_ref[...] = acc_ref[...].astype(o_ref.dtype)


def _gemma_mlp_kernel_single(x_ref, wgu_ref, wd_ref, o_ref):
    # Single intermediate tile (I == ti): no accumulator scratch, no init/
    # finalize phases -- write the down-proj result straight to o_ref.
    x = x_ref[...]
    gu = jnp.dot(x, wgu_ref[...], preferred_element_type=jnp.float32)
    ti = gu.shape[1] // 2
    h = _gelu_tanh(gu[:, :ti]) * gu[:, ti:]
    o_ref[...] = jnp.dot(h.astype(wd_ref.dtype), wd_ref[...],
                         preferred_element_type=jnp.float32).astype(o_ref.dtype)


# ---------------------------------------------------------------------------
# Tiling / budgeting helpers
# ---------------------------------------------------------------------------

def _round_up(a, b):
    return (a + b - 1) // b * b


def _choose_ti(intermediate, ti_request):
    """Largest multiple of 128 that divides I and is <= request (or full I)."""
    if intermediate <= 128 or intermediate % 128 != 0:
        return intermediate
    ti = min(ti_request, intermediate)
    ti = (ti // 128) * 128
    while intermediate % ti != 0:
        ti -= 128
    return ti


def _tpu_generation():
    try:
        kind = jax.devices()[0].device_kind.lower()
    except Exception:
        return 0
    for g in (7, 6, 5, 4):
        if "v%d" % g in kind:
            return g
    return 0


def _default_tiles(gen):
    """Per-generation (tm, ti_request, physical VMEM bytes)."""
    if gen >= 7:
        # v7x: 64 MiB VMEM per TC, 2 TCs each re-stream the weights.
        return 512, 512, 64 << 20
    if gen == 6:
        # v6e: ridge ~650 flops/B -> need a big token tile to be MXU-bound.
        return 1024, 512, 128 << 20
    if gen == 5:
        # v5e: tm=256 bf16 is already near the ~240 flops/B ridge; bigger ti
        # amortizes per-grid-step overhead and issues larger weight DMAs.
        return 256, 2048, 128 << 20
    # Unknown part: conservative sizes and the small (v7x-like) VMEM cap.
    return 256, 512, 64 << 20


def _vmem_bytes(tm, ti, H, x_item, w_item, multi_k):
    """Honest VMEM footprint: double-buffered tiles + scratch + f32 temporaries."""
    x_buf = 2 * tm * H * x_item          # x tile (double-buffered)
    wgu_buf = 2 * H * (2 * ti) * w_item  # fused gate/up column tile
    wd_buf = 2 * ti * H * w_item         # down-proj row tile
    o_buf = 2 * tm * H * x_item          # output tile
    acc = tm * H * 4 if multi_k else 0   # f32 accumulator scratch
    gu_tmp = tm * (2 * ti) * 4           # f32 gate/up matmul result
    h_tmp = tm * ti * 4                  # gelu(gate)*up temporary
    return x_buf + wgu_buf + wd_buf + o_buf + acc + gu_tmp + h_tmp


# ---------------------------------------------------------------------------
# Wrapper
# ---------------------------------------------------------------------------

def gemma_mlp(x, wg, wu, wd, *, tm=None, ti=None):
    """x: [T, H]; wg/wu: [H, I]; wd: [I, H]  ->  [T, H]"""
    T, H = x.shape
    I = wg.shape[1]
    assert wg.shape == (H, I) and wu.shape == (H, I) and wd.shape == (I, H)

    gen = _tpu_generation()
    tm_def, ti_req, vmem_cap = _default_tiles(gen)
    if tm is None:
        tm = tm_def
    if ti is None:
        ti = _choose_ti(I, ti_req)
    assert I % ti == 0 and (ti % 128 == 0 or ti == I), "bad intermediate tile"
    nk = I // ti

    # Token tile: multiple of 8 (sublane); never bigger than the padded stream.
    tm_eff = _round_up(min(tm, _round_up(T, 8)), 8)

    # v7x megacore: prefer >=2 token tiles so both TensorCores get work
    # (each TC independently re-streams the weights along the k axis).
    if gen >= 7 and tm_eff >= _round_up(T, 8) and tm_eff >= 256:
        tm_eff = _round_up((_round_up(T, 8) + 1) // 2, 8)

    # Shrink the token tile until the working set honestly fits physical VMEM.
    x_item = jnp.dtype(x.dtype).itemsize
    w_item = jnp.dtype(wg.dtype).itemsize
    headroom = 8 << 20
    while (tm_eff > 64 and
           _vmem_bytes(tm_eff, ti, H, x_item, w_item, nk > 1) > vmem_cap - headroom):
        tm_eff = max(64, _round_up(tm_eff // 2, 8))

    T_pad = _round_up(T, tm_eff)
    x_p = x if T_pad == T else jnp.pad(x, ((0, T_pad - T), (0, 0)))
    nt = T_pad // tm_eff

    # Fused gate/up weight stream: interleave per-ti-tile blocks so each k-step
    # pulls one contiguous (H, 2*ti) slab == [gate_tile_k | up_tile_k].
    # TODO(synk): in production, pre-pack this once at weight-load time instead
    # of per forward call.
    wgu = jnp.concatenate(
        [wg.reshape(H, nk, ti), wu.reshape(H, nk, ti)], axis=2).reshape(H, 2 * I)

    need = _vmem_bytes(tm_eff, ti, H, x_item, w_item, nk > 1)
    vmem_limit = int(need * 1.25) + (4 << 20)
    vmem_limit = min(max(vmem_limit, 32 << 20), vmem_cap - headroom)

    # Note: deeper weight buffering (pipeline_mode=pl.Buffered(3)) is an option
    # on 128 MiB parts (v5e/v6e) but is intentionally not enabled here.

    if nk == 1:
        out = pl.pallas_call(
            _gemma_mlp_kernel_single,
            out_shape=jax.ShapeDtypeStruct((T_pad, H), x.dtype),
            grid_spec=pltpu.PrefetchScalarGridSpec(
                num_scalar_prefetch=0,
                grid=(nt,),
                in_specs=[
                    pl.BlockSpec((tm_eff, H), lambda i: (i, 0)),   # x token tile
                    pl.BlockSpec((H, 2 * ti), lambda i: (0, 0)),   # fused Wg|Wu
                    pl.BlockSpec((ti, H), lambda i: (0, 0)),       # Wd
                ],
                out_specs=pl.BlockSpec((tm_eff, H), lambda i: (i, 0)),
            ),
            compiler_params=pltpu.CompilerParams(
                dimension_semantics=("parallel",),
                vmem_limit_bytes=vmem_limit,
            ),
        )(x_p, wgu, wd)
    else:
        out = pl.pallas_call(
            _gemma_mlp_kernel_acc,
            out_shape=jax.ShapeDtypeStruct((T_pad, H), x.dtype),
            grid_spec=pltpu.PrefetchScalarGridSpec(
                num_scalar_prefetch=0,
                grid=(nt, nk),
                in_specs=[
                    pl.BlockSpec((tm_eff, H), lambda i, k: (i, 0)),   # x (resident over k)
                    pl.BlockSpec((H, 2 * ti), lambda i, k: (0, k)),   # fused Wg|Wu tile
                    pl.BlockSpec((ti, H), lambda i, k: (k, 0)),       # Wd row tile
                ],
                out_specs=pl.BlockSpec((tm_eff, H), lambda i, k: (i, 0)),
                scratch_shapes=[pltpu.VMEM((tm_eff, H), jnp.float32)],
            ),
            compiler_params=pltpu.CompilerParams(
                dimension_semantics=("parallel", "arbitrary"),
                vmem_limit_bytes=vmem_limit,
            ),
        )(x_p, wgu, wd)

    return out if T_pad == T else out[:T]


def gemma_mlp_ref(x, wg, wu, wd):
    gate = x @ wg
    up = x @ wu
    return (_gelu_tanh(gate) * up) @ wd


if __name__ == "__main__":
    # Small Gemma-like config: hidden=64, intermediate=256, 19 unpadded tokens.
    # T=19 exercises the token-padding path; ti=128 forces 2 intermediate grid
    # steps (accumulator kernel); default ti (== I) exercises the single-step
    # kernel without the accumulator scratch.
    T, H, I = 19, 64, 256
    key = jax.random.PRNGKey(0)
    kx, kg, ku, kd = jax.random.split(key, 4)

    x = jax.random.normal(kx, (T, H), dtype=jnp.float32)
    # nn.Linear weight shapes are [out, in]; we store the transpose for matmul.
    wg = (jax.random.normal(kg, (I, H), dtype=jnp.float32) * 0.02).T  # [H, I]
    wu = (jax.random.normal(ku, (I, H), dtype=jnp.float32) * 0.02).T  # [H, I]
    wd = (jax.random.normal(kd, (H, I), dtype=jnp.float32) * 0.02).T  # [I, H]

    ref = gemma_mlp_ref(x, wg, wu, wd)

    # f32, multi-step intermediate axis (accumulator kernel).
    out_acc = jax.block_until_ready(gemma_mlp(x, wg, wu, wd, ti=128))
    assert out_acc.shape == (T, H)
    assert jnp.allclose(out_acc, ref, atol=1e-5, rtol=1e-5), "f32 acc-path mismatch"

    # f32, single-step intermediate axis (no-accumulator kernel).
    out_single = jax.block_until_ready(gemma_mlp(x, wg, wu, wd))
    assert out_single.shape == (T, H)
    assert jnp.allclose(out_single, ref, atol=1e-5, rtol=1e-5), "f32 single-path mismatch"

    # bf16 run (production dtype for the MXU): loose check against f32 reference.
    xb, wgb, wub, wdb = (a.astype(jnp.bfloat16) for a in (x, wg, wu, wd))
    out_bf16 = jax.block_until_ready(gemma_mlp(xb, wgb, wub, wdb, ti=128))
    assert out_bf16.shape == (T, H)
    assert jnp.allclose(out_bf16.astype(jnp.float32), ref, atol=5e-3, rtol=5e-2), \
        "bf16 mismatch vs reference"

    print("KERNEL_OK")
</pallas_src>

<mosaic_0001>
module attributes {stable_mosaic.version = 11 : i64} {
  func.func @_gemma_mlp_kernel_acc(%arg0: i32, %arg1: i32, %arg2: memref<24x64xf32, #tpu.memory_space<vmem>>, %arg3: memref<64x256xf32, #tpu.memory_space<vmem>>, %arg4: memref<128x64xf32, #tpu.memory_space<vmem>>, %arg5: memref<24x64xf32, #tpu.memory_space<vmem>>, %arg6: memref<24x64xf32, #tpu.memory_space<vmem>>) attributes {dimension_semantics = [#tpu.dimension_semantics<parallel>, #tpu.dimension_semantics<arbitrary>], iteration_bounds = array<i64: 1, 2>, scalar_prefetch = 0 : i64, scratch_operands = 1 : i64, tpu.core_type = #tpu.core_type<tc>, window_params = [{transform_indices = @transform_0, window_bounds = array<i64: 24, 64>}, {transform_indices = @transform_1, window_bounds = array<i64: 64, 256>}, {transform_indices = @transform_2, window_bounds = array<i64: 128, 64>}, {transform_indices = @transform_3, window_bounds = array<i64: 24, 64>}]} {
    %c0_i32 = arith.constant 0 : i32
    %0 = arith.cmpi eq, %arg1, %c0_i32 : i32
    %1 = arith.extui %0 : i1 to i32
    %c0_i32_0 = arith.constant 0 : i32
    %2 = arith.cmpi ne, %1, %c0_i32_0 : i32
    scf.if %2 {
      %cst_16 = arith.constant 0.000000e+00 : f32
      %31 = vector.broadcast %cst_16 : f32 to vector<24x64xf32>
      %c0_17 = arith.constant 0 : index
      %c0_18 = arith.constant 0 : index
      %32 = vector.load %arg6[%c0_17, %c0_18] : memref<24x64xf32, #tpu.memory_space<vmem>>, vector<24x64xf32>
      tpu.vector_store %arg6[%c0_17, %c0_18], %31 {strides = array<i32>} : memref<24x64xf32, #tpu.memory_space<vmem>>, vector<24x64xf32>,
    } else {
    }
    %c0 = arith.constant 0 : index
    %c0_1 = arith.constant 0 : index
    %3 = vector.load %arg2[%c0, %c0_1] : memref<24x64xf32, #tpu.memory_space<vmem>>, vector<24x64xf32>
    %c0_2 = arith.constant 0 : index
    %c0_3 = arith.constant 0 : index
    %4 = vector.load %arg3[%c0_2, %c0_3] : memref<64x256xf32, #tpu.memory_space<vmem>>, vector<64x256xf32>
    %cst = arith.constant dense<0.000000e+00> : vector<24x256xf32>
    %5 = tpu.matmul %3, %4, %cst {dimension_numbers = #tpu.dot_dimension_numbers<[1], [0], [0], [1], [0, 0, 1, 1], [], []>} : vector<24x64xf32>, vector<64x256xf32>, vector<24x256xf32> -> vector<24x256xf32>
    %6 = vector.extract_strided_slice %5 {offsets = [0, 0], sizes = [24, 128], strides = [1, 1]} : vector<24x256xf32> to vector<24x128xf32>
    %cst_4 = arith.constant 0.636619746 : f32
    %7 = math.sqrt %cst_4 : f32
    %cst_5 = arith.constant 5.000000e-01 : f32
    %8 = vector.broadcast %cst_5 : f32 to vector<24x128xf32>
    %9 = arith.mulf %8, %6 : vector<24x128xf32>
    %cst_6 = arith.constant 4.471500e-02 : f32
    %10 = vector.broadcast %cst_6 : f32 to vector<24x128xf32>
    %11 = arith.mulf %10, %6 : vector<24x128xf32>
    %12 = arith.mulf %11, %6 : vector<24x128xf32>
    %13 = arith.mulf %12, %6 : vector<24x128xf32>
    %14 = arith.addf %6, %13 : vector<24x128xf32>
    %15 = vector.broadcast %7 : f32 to vector<24x128xf32>
    %16 = arith.mulf %15, %14 : vector<24x128xf32>
    %17 = math.tanh %16 : vector<24x128xf32>
    %cst_7 = arith.constant 1.000000e+00 : f32
    %18 = vector.broadcast %cst_7 : f32 to vector<24x128xf32>
    %19 = arith.addf %18, %17 : vector<24x128xf32>
    %20 = arith.mulf %9, %19 : vector<24x128xf32>
    %21 = vector.extract_strided_slice %5 {offsets = [0, 128], sizes = [24, 128], strides = [1, 1]} : vector<24x256xf32> to vector<24x128xf32>
    %22 = arith.mulf %20, %21 : vector<24x128xf32>
    %c0_8 = arith.constant 0 : index
    %c0_9 = arith.constant 0 : index
    %23 = vector.load %arg6[%c0_8, %c0_9] : memref<24x64xf32, #tpu.memory_space<vmem>>, vector<24x64xf32>
    %c0_10 = arith.constant 0 : index
    %c0_11 = arith.constant 0 : index
    %24 = vector.load %arg4[%c0_10, %c0_11] : memref<128x64xf32, #tpu.memory_space<vmem>>, vector<128x64xf32>
    %cst_12 = arith.constant dense<0.000000e+00> : vector<24x64xf32>
    %25 = tpu.matmul %22, %24, %cst_12 {dimension_numbers = #tpu.dot_dimension_numbers<[1], [0], [0], [1], [0, 0, 1, 1], [], []>} : vector<24x128xf32>, vector<128x64xf32>, vector<24x64xf32> -> vector<24x64xf32>
    %26 = arith.addf %23, %25 : vector<24x64xf32>
    %c0_13 = arith.constant 0 : index
    %c0_14 = arith.constant 0 : index
    %27 = vector.load %arg6[%c0_13, %c0_14] : memref<24x64xf32, #tpu.memory_space<vmem>>, vector<24x64xf32>
    tpu.vector_store %arg6[%c0_13, %c0_14], %26 {strides = array<i32>} : memref<24x64xf32, #tpu.memory_space<vmem>>, vector<24x64xf32>,
    %c1_i32 = arith.constant 1 : i32
    %28 = arith.cmpi eq, %arg1, %c1_i32 : i32
    %29 = arith.extui %28 : i1 to i32
    %c0_i32_15 = arith.constant 0 : i32
    %30 = arith.cmpi ne, %29, %c0_i32_15 : i32
    scf.if %30 {
      %c0_16 = arith.constant 0 : index
      %c0_17 = arith.constant 0 : index
      %31 = vector.load %arg6[%c0_16, %c0_17] : memref<24x64xf32, #tpu.memory_space<vmem>>, vector<24x64xf32>
      %c0_18 = arith.constant 0 : index
      %c0_19 = arith.constant 0 : index
      %32 = vector.load %arg5[%c0_18, %c0_19] : memref<24x64xf32, #tpu.memory_space<vmem>>, vector<24x64xf32>
      tpu.vector_store %arg5[%c0_18, %c0_19], %31 {strides = array<i32>} : memref<24x64xf32, #tpu.memory_space<vmem>>, vector<24x64xf32>,
    } else {
    }
    return
  }
  func.func @transform_0(%arg0: i32, %arg1: i32) -> (i32, i32) {
    %c0_i32 = arith.constant 0 : i32
    %c0_i32_0 = arith.constant 0 : i32
    return %arg0, %c0_i32 : i32, i32
  }
  func.func @transform_1(%arg0: i32, %arg1: i32) -> (i32, i32) {
    %c0_i32 = arith.constant 0 : i32
    %c0_i32_0 = arith.constant 0 : i32
    return %c0_i32, %arg1 : i32, i32
  }
  func.func @transform_2(%arg0: i32, %arg1: i32) -> (i32, i32) {
    %c0_i32 = arith.constant 0 : i32
    %c0_i32_0 = arith.constant 0 : i32
    return %arg1, %c0_i32 : i32, i32
  }
  func.func @transform_3(%arg0: i32, %arg1: i32) -> (i32, i32) {
    %c0_i32 = arith.constant 0 : i32
    %c0_i32_0 = arith.constant 0 : i32
    return %arg0, %c0_i32 : i32, i32
  }
}

</mosaic_0001>

<llo_original>
// kernel: tpu_custom_call.1
$region0: #{tpu_custom_call.1}
  #allocation0 [shape = 'u32[]', space=smem, size = 0x4, offset = 0x4, fixed_abs, tag = 'smem constant byte address 0x4 - core index']
  #allocation1 [shape = 'u32[144,128]{1,0:T(1,128)}', space=vmem, size = 0x12000, scoped, tag = 'internal scratch']
  #allocation2 [shape = 'f32[24,64]{1,0:T(8,128)}', space=vmem, size = 0x3000, scoped, tag = 'scratch operand']
  %s0 = inlined_call_operand.vmem [shape: f32[24,64], index: 0, kind: input, shape index: {}]
  %s1 = inlined_call_operand.vmem [shape: f32[64,512], index: 1, kind: input, shape index: {}]
  %s2 = inlined_call_operand.vmem [shape: f32[256,64], index: 2, kind: input, shape index: {}]
  %s3 = inlined_call_operand.hbm [shape: f32[24,64], index: 3, kind: output, shape index: {}]
  %s4 = sld [smem:[#allocation0]]
  $region76: #{tpu_custom_call.1} parent=0
    _
  %s6 = ssub.s32 1, %s4
  %s7 = scalar_select 0, %s6, %s4
  $region1: #{tpu_custom_call.1} parent=0
    #allocation3 [shape = 'u8[131072]{0}', space=vmem, size = 0x20000, scoped, tag = 'input window, operand 1']
    #allocation4 [shape = 'u8[12288]{0}', space=vmem, size = 0x3000, scoped, tag = 'output window, operand 0, single buffered']
    #allocation5 [shape = 's32[2]{0}', space=sflag, size = 0x8, scoped, tag = 'scoped memory for tpu_custom_call.1']
    %8 = vsyncpa [#allocation5], 0
    loop: start=0, step=1, limit=4
    $region2: #{tpu_custom_call.1} parent=1 // loop_pre_header
      _
    $region3: #{tpu_custom_call.1} parent=1 // loop_header
      %s10 = sphi 0, %s14
      %p11 = scmp.ge.s32.totalorder %s10, 4
      %s17 = sphi 0, %s29
      %s18 = sphi 0, %s25
      %s19 = sphi 0, %s17
      %s20 = sphi 0, %s18
      %s21 = sphi 0, %s19
      %s22 = sphi 0, %s20
      %s32 = sphi 0, %s34
      %s35 = sphi 0, %s32
      %s36 = sphi 0, %s35
      %s52 = sphi 0, %s36
      %s58 = sphi 0, %s60
      %s61 = sphi 0, %s58
      %s62 = sphi 0, %s61
      %s78 = sphi 0, %s62
      %s84 = sphi 0, %s86
      %s87 = sphi 0, %s84
      %s88 = sphi 0, %s87
      %s104 = sphi 0, %s88
      %s110 = sphi 0, %s112
      %s113 = sphi 0, %s110
      %s114 = sphi 0, %s113
      %s130 = sphi 0, %s114
    $region4: #{tpu_custom_call.1} parent=1 // loop_header_branch
      %13 = sbr.rel (%p11) target = $region8
    $region5: #{tpu_custom_call.1} parent=1 // loop_body
      %s15 = ssub.s32 %s10, 1
      %s16 = ssub.s32 %s10, 2
      %s23 = sadd.s32 1, %s18
      %p24 = scmp.ge.s32.totalorder %s23, 2
      %s25 = scalar_select %p24, 0, %s23
      %s26 = sadd.s32 1, %s17
      %s27 = scalar_select %p24, %s26, %s17
      %p28 = scmp.ge.s32.totalorder %s27, 1
      %s29 = scalar_select %p28, 0, %s27
      %s30 = ssub.s32 %s17, %s29
      %p31 = scmp.eq.s32.totalorder %s30, 0
      %s33 = sadd.s32 %s32, 1
      %s34 = scalar_select %p31, %s32, %s33
      %p37 = pneg %p31
      %p38 = scmp.eq.s32.totalorder %s10, 1
      %p39 = por %p37, %p38
      %p40 = scmp.ne.s32.totalorder %s32, %s35
      %p41 = scmp.eq.s32.totalorder %s10, 0
      %p42 = por %p40, %p41
      %p43 = scmp.ne.s32.totalorder %s32, %s35
      %p44 = scmp.eq.s32.totalorder %s15, 1
      %p45 = por %p43, %p44
      %p46 = scmp.ne.s32.totalorder %s35, %s36
      %p47 = scmp.eq.s32.totalorder %s15, 0
      %p48 = por %p46, %p47
      %p49 = scmp.ne.s32.totalorder %s35, %s36
      %p50 = scmp.eq.s32.totalorder %s16, 1
      %p51 = por %p49, %p50
      %p53 = scmp.ne.s32.totalorder %s36, %s52
      %p54 = scmp.eq.s32.totalorder %s16, 0
      %p55 = por %p53, %p54
      %s56 = ssub.s32 %s18, %s25
      %p57 = scmp.eq.s32.totalorder %s56, 0
      %s59 = sadd.s32 %s58, 1
      %s60 = scalar_select %p57, %s58, %s59
      %p63 = pneg %p57
      %p64 = scmp.eq.s32.totalorder %s10, 1
      %p65 = por %p63, %p64
      %p66 = scmp.ne.s32.totalorder %s58, %s61
      %p67 = scmp.eq.s32.totalorder %s10, 0
      %p68 = por %p66, %p67
      %p69 = scmp.ne.s32.totalorder %s58, %s61
      %p70 = scmp.eq.s32.totalorder %s15, 1
      %p71 = por %p69, %p70
      %p72 = scmp.ne.s32.totalorder %s61, %s62
      %p73 = scmp.eq.s32.totalorder %s15, 0
      %p74 = por %p72, %p73
      %p75 = scmp.ne.s32.totalorder %s61, %s62
      %p76 = scmp.eq.s32.totalorder %s16, 1
      %p77 = por %p75, %p76
      %p79 = scmp.ne.s32.totalorder %s62, %s78
      %p80 = scmp.eq.s32.totalorder %s16, 0
      %p81 = por %p79, %p80
      %s82 = ssub.s32 %s18, %s25
      %p83 = scmp.eq.s32.totalorder %s82, 0
      %s85 = sadd.s32 %s84, 1
      %s86 = scalar_select %p83, %s84, %s85
      %p89 = pneg %p83
      %p90 = scmp.eq.s32.totalorder %s10, 1
      %p91 = por %p89, %p90
      %p92 = scmp.ne.s32.totalorder %s84, %s87
      %p93 = scmp.eq.s32.totalorder %s10, 0
      %p94 = por %p92, %p93
      %p95 = scmp.ne.s32.totalorder %s84, %s87
      %p96 = scmp.eq.s32.totalorder %s15, 1
      %p97 = por %p95, %p96
      %p98 = scmp.ne.s32.totalorder %s87, %s88
      %p99 = scmp.eq.s32.totalorder %s15, 0
      %p100 = por %p98, %p99
      %p101 = scmp.ne.s32.totalorder %s87, %s88
      %p102 = scmp.eq.s32.totalorder %s16, 1
      %p103 = por %p101, %p102
      %p105 = scmp.ne.s32.totalorder %s88, %s104
      %p106 = scmp.eq.s32.totalorder %s16, 0
      %p107 = por %p105, %p106
      %s108 = ssub.s32 %s17, %s29
      %p109 = scmp.eq.s32.totalorder %s108, 0
      %s111 = sadd.s32 %s110, 1
      %s112 = scalar_select %p109, %s110, %s111
      %p115 = pneg %p109
      %p116 = scmp.eq.s32.totalorder %s10, 1
      %p117 = por %p115, %p116
      %p118 = scmp.ne.s32.totalorder %s110, %s113
      %p119 = scmp.eq.s32.totalorder %s10, 0
      %p120 = por %p118, %p119
      %p121 = scmp.ne.s32.totalorder %s110, %s113
      %p122 = scmp.eq.s32.totalorder %s15, 1
      %p123 = por %p121, %p122
      %p124 = scmp.ne.s32.totalorder %s113, %s114
      %p125 = scmp.eq.s32.totalorder %s15, 0
      %p126 = por %p124, %p125
      %p127 = scmp.ne.s32.totalorder %s113, %s114
      %p128 = scmp.eq.s32.totalorder %s16, 1
      %p129 = por %p127, %p128
      %p131 = scmp.ne.s32.totalorder %s114, %s130
      %p132 = scmp.eq.s32.totalorder %s16, 0
      %p133 = por %p131, %p132
      %p134 = scmp.le.s32.totalorder 1, %s10
      %p135 = scmp.lt.s32.totalorder %s10, 3
      %p136 = pnand %p134, %p135
      %p137 = pneg %p136
      // Predicated region
      $region9: #{tpu_custom_call.1} parent=5 // pred_check
        _
      $region10: #{tpu_custom_call.1} parent=5 // pred_check_branch
        %139 = sbr.rel (%p136) target = $region12
      $region11: #{tpu_custom_call.1} parent=5 // pred_region
        %s140 = ssub.s32 %s10, 1
        // Predicated region
        $region13: #{tpu_custom_call.1} parent=11 // pred_check
          %p141 = pneg %p48
        $region14: #{tpu_custom_call.1} parent=11 // pred_check_branch
          %143 = sbr.rel (%p141) target = $region16
        $region15: #{tpu_custom_call.1} parent=11 // pred_region
          %s144 = smul.u32 3, %s19
          %p145 = scmp.lt.s32.totalorder %s144, 2
          %s146 = scalar_select %p145, %s144, 2
          %s147 = smul.addr %s146, 8
          %s148 = scalar_lea.vmem %s0, %s147
          %s149 = smul.u32 3, %s19
        $region16: #{tpu_custom_call.1} parent=11 // pred_fallthru
          _
      $region12: #{tpu_custom_call.1} parent=5 // pred_fallthru
        _
      %p150 = scmp.lt.s32.totalorder %s10, 2
      // Predicated region
      $region17: #{tpu_custom_call.1} parent=5 // pred_check
        %p151 = pneg %p150
      $region18: #{tpu_custom_call.1} parent=5 // pred_check_branch
        %153 = sbr.rel (%p151) target = $region20
      $region19: #{tpu_custom_call.1} parent=5 // pred_region
        // Predicated region
        $region21: #{tpu_custom_call.1} parent=19 // pred_check
          %p154 = pneg %p68
        $region22: #{tpu_custom_call.1} parent=19 // pred_check_branch
          %156 = sbr.rel (%p154) target = $region24
        $region23: #{tpu_custom_call.1} parent=19 // pred_region
          %s157 = sand.u32 %s58, 1
          %s158 = sand.u32 %s58, 1
          %s159 = smul.addr %s158, 128
          %s160 = scalar_lea.vmem [#allocation3], %s159
          %s161 = smul.u32 2, %s18
          %s162 = smul.addr %s161, 8
          %s163 = scalar_lea.vmem %s1, %s162
          // Predicated region
          $region25: #{tpu_custom_call.1} parent=23 // pred_check
            _
          $region26: #{tpu_custom_call.1} parent=23 // pred_check_branch
            %165 = sbr.rel (0) target = $region28
          $region27: #{tpu_custom_call.1} parent=23 // pred_region
            // Predicated region
            $region29: #{tpu_custom_call.1} parent=27 // pred_check
              _
            $region30: #{tpu_custom_call.1} parent=27 // pred_check_branch
              %167 = sbr.rel (0) target = $region32
            $region31: #{tpu_custom_call.1} parent=27 // pred_region
              loop: start=0, step=1, limit=1
              $region33: #{tpu_custom_call.1} parent=31 // loop_pre_header
                _
              $region34: #{tpu_custom_call.1} parent=31 // loop_header
                %s169 = sphi 0, %s173
                %p170 = scmp.ge.s32.totalorder %s169, 1
                %s174 = sphi %s163, %s163
                %s175 = sphi %s160, %s160
              $region35: #{tpu_custom_call.1} parent=31 // loop_header_branch
                %172 = sbr.rel (%p170) target = $region39
              $region36: #{tpu_custom_call.1} parent=31 // loop_body
                %v176 = vld [vmem:[%s174] sm:$0xff]
                %177 = vst [vmem:[%s175] sm:$0xff] %v176
                %v178 = vld [vmem:[%s174 + $0x8] sm:$0xff]
                %179 = vst [vmem:[%s175 + $0x8] sm:$0xff] %v178
                %v180 = vld [vmem:[%s174 + $0x20] sm:$0xff]
                %181 = vst [vmem:[%s175 + $0x10] sm:$0xff] %v180
                %v182 = vld [vmem:[%s174 + $0x28] sm:$0xff]
                %183 = vst [vmem:[%s175 + $0x18] sm:$0xff] %v182
                %v184 = vld [vmem:[%s174 + $0x40] sm:$0xff]
                %185 = vst [vmem:[%s175 + $0x20] sm:$0xff] %v184
                %v186 = vld [vmem:[%s174 + $0x48] sm:$0xff]
                %187 = vst [vmem:[%s175 + $0x28] sm:$0xff] %v186
                %v188 = vld [vmem:[%s174 + $0x60] sm:$0xff]
                %189 = vst [vmem:[%s175 + $0x30] sm:$0xff] %v188
                %v190 = vld [vmem:[%s174 + $0x68] sm:$0xff]
                %191 = vst [vmem:[%s175 + $0x38] sm:$0xff] %v190
                %v192 = vld [vmem:[%s174 + $0x80] sm:$0xff]
                %193 = vst [vmem:[%s175 + $0x40] sm:$0xff] %v192
                %v194 = vld [vmem:[%s174 + $0x88] sm:$0xff]
                %195 = vst [vmem:[%s175 + $0x48] sm:$0xff] %v194
                %v196 = vld [vmem:[%s174 + $0xa0] sm:$0xff]
                %197 = vst [vmem:[%s175 + $0x50] sm:$0xff] %v196
                %v198 = vld [vmem:[%s174 + $0xa8] sm:$0xff]
                %199 = vst [vmem:[%s175 + $0x58] sm:$0xff] %v198
                %v200 = vld [vmem:[%s174 + $0xc0] sm:$0xff]
                %201 = vst [vmem:[%s175 + $0x60] sm:$0xff] %v200
                %v202 = vld [vmem:[%s174 + $0xc8] sm:$0xff]
                %203 = vst [vmem:[%s175 + $0x68] sm:$0xff] %v202
                %v204 = vld [vmem:[%s174 + $0xe0] sm:$0xff]
                %205 = vst [vmem:[%s175 + $0x70] sm:$0xff] %v204
                %v206 = vld [vmem:[%s174 + $0xe8] sm:$0xff]
                %207 = vst [vmem:[%s175 + $0x78] sm:$0xff] %v206
              $region37: #{tpu_custom_call.1} parent=31 // loop_footer
                %s173 = sadd.s32 1, %s169
              $region38: #{tpu_custom_call.1} parent=31 // loop_footer_branch
                %168 = sbr.rel target = $region34
              $region39: #{tpu_custom_call.1} parent=31 // loop_exit
                _
            $region32: #{tpu_custom_call.1} parent=27 // pred_fallthru
              _
            // Predicated region
            $region40: #{tpu_custom_call.1} parent=27 // pred_check
              _
            $region41: #{tpu_custom_call.1} parent=27 // pred_check_branch
              %209 = sbr.rel target = $region43
            $region42: #{tpu_custom_call.1} parent=27 // pred_region
              _
            $region43: #{tpu_custom_call.1} parent=27 // pred_fallthru
              _
          $region28: #{tpu_custom_call.1} parent=23 // pred_fallthru
            _
          %210 = vnop
        $region24: #{tpu_custom_call.1} parent=19 // pred_fallthru
          _
        // Predicated region
        $region44: #{tpu_custom_call.1} parent=19 // pred_check
          %p211 = pneg %p94
        $region45: #{tpu_custom_call.1} parent=19 // pred_check_branch
          %213 = sbr.rel (%p211) target = $region47
        $region46: #{tpu_custom_call.1} parent=19 // pred_region
          %s214 = smul.u32 16, %s18
          %p215 = scmp.lt.s32.totalorder %s214, 31
          %s216 = scalar_select %p215, %s214, 31
          %s217 = smul.addr %s216, 8
          %s218 = scalar_lea.vmem %s2, %s217
          %s219 = smul.u32 16, %s18
        $region47: #{tpu_custom_call.1} parent=19 // pred_fallthru
          _
      $region20: #{tpu_custom_call.1} parent=5 // pred_fallthru
        _
      %p220 = scmp.le.s32.totalorder 1, %s10
      %p221 = scmp.lt.s32.totalorder %s10, 3
      %p222 = pnand %p220, %p221
      %p223 = pneg %p222
      // Predicated region
      $region48: #{tpu_custom_call.1} parent=5 // pred_check
        _
      $region49: #{tpu_custom_call.1} parent=5 // pred_check_branch
        %225 = sbr.rel (%p222) target = $region51
      $region50: #{tpu_custom_call.1} parent=5 // pred_region
        %s226 = ssub.s32 %s10, 1
        %s227 = sand.u32 %s61, 1
        %s228 = sand.u32 %s61, 1
        %s229 = smul.addr %s228, 128
        %s230 = scalar_lea.vmem [#allocation3], %s229
        // Predicated region
        $region52: #{tpu_custom_call.1} parent=50 // pred_check
          %p231 = pneg %p74
        $region53: #{tpu_custom_call.1} parent=50 // pred_check_branch
          %233 = sbr.rel (%p231) target = $region55
        $region54: #{tpu_custom_call.1} parent=50 // pred_region
          _
        $region55: #{tpu_custom_call.1} parent=50 // pred_fallthru
          _
        %s234 = smul.u32 3, %s19
        %p235 = scmp.lt.s32.totalorder %s234, 2
        %s236 = scalar_select %p235, %s234, 2
        %s237 = smul.addr %s236, 8
        %s238 = scalar_lea.vmem %s0, %s237
        %p239 = pneg %p48
        %p240 = pneg %p45
        %s241 = sand.u32 %s61, 1
        %s242 = sand.u32 %s61, 1
        %s243 = smul.addr %s242, 128
        %s244 = scalar_lea.vmem [#allocation3], %s243
        %p245 = pneg %p74
        %p246 = pneg %p71
        %s247 = smul.u32 16, %s20
        %p248 = scmp.lt.s32.totalorder %s247, 31
        %s249 = scalar_select %p248, %s247, 31
        %s250 = smul.addr %s249, 8
        %s251 = scalar_lea.vmem %s2, %s250
        %p252 = pneg %p100
        %p253 = pneg %p97
        %p254 = pneg %p126
        %p255 = pneg %p123
        %s256 = smul.u32 3, %s19
        %p257 = scmp.lt.s32.totalorder %s256, 2
        %s258 = scalar_select %p257, %s256, 2
        %s259 = smul.addr %s258, 8
        %s260 = scalar_lea.vmem %s0, %s259
        %s261 = smul.u32 3, %s19
        %s262 = smul.u32 2, %s20
        %s263 = smul.u32 16, %s20
        %p264 = scmp.lt.s32.totalorder %s263, 31
        %s265 = scalar_select %p264, %s263, 31
        %s266 = smul.addr %s265, 8
        %s267 = scalar_lea.vmem %s2, %s266
        %s268 = smul.u32 16, %s20
        %s269 = smul.u32 3, %s19
        %p270 = scmp.eq.s32.totalorder %s20, 0
        // Predicated region
        $region56: #{tpu_custom_call.1} parent=50 // pred_check
          %p271 = pneg %p270
        $region57: #{tpu_custom_call.1} parent=50 // pred_check_branch
          %273 = sbr.rel (%p271) target = $region59
        $region58: #{tpu_custom_call.1} parent=50 // pred_region
          %vm274 = vcmask 523264
          %275 = vst.msk [vmem:[#allocation2] sm:$0xff] %vm274, 0.0
          %276 = vst.msk [vmem:[#allocation2 + $0x8] sm:$0xff] %vm274, 0.0
          %277 = vst.msk [vmem:[#allocation2 + $0x10] sm:$0xff] %vm274, 0.0
        $region59: #{tpu_custom_call.1} parent=50 // pred_fallthru
          _
        %v278 = vld [vmem:[%s260] sm:$0xff]
        %v279 = vld [vmem:[%s260 + $0x8] sm:$0xff]
        %v280 = vld [vmem:[%s260 + $0x10] sm:$0xff]
        %v281 = vld [vmem:[%s230] sm:$0xff]
        %v282 = vld [vmem:[%s230 + $0x8] sm:$0xff]
        %v283 = vld [vmem:[%s230 + $0x10] sm:$0xff]
        %v284 = vld [vmem:[%s230 + $0x18] sm:$0xff]
        %v285 = vld [vmem:[%s230 + $0x20] sm:$0xff]
        %v286 = vld [vmem:[%s230 + $0x28] sm:$0xff]
        %v287 = vld [vmem:[%s230 + $0x30] sm:$0xff]
        %v288 = vld [vmem:[%s230 + $0x38] sm:$0xff]
        %v289 = vld [vmem:[%s230 + $0x40] sm:$0xff]
        %v290 = vld [vmem:[%s230 + $0x48] sm:$0xff]
        %v291 = vld [vmem:[%s230 + $0x50] sm:$0xff]
        %v292 = vld [vmem:[%s230 + $0x58] sm:$0xff]
        %v293 = vld [vmem:[%s230 + $0x60] sm:$0xff]
        %v294 = vld [vmem:[%s230 + $0x68] sm:$0xff]
        %v295 = vld [vmem:[%s230 + $0x70] sm:$0xff]
        %v296 = vld [vmem:[%s230 + $0x78] sm:$0xff]
        %vm297 = vcmask 523264
        %v299 = vsel %vm297, %v278, 0
        %v302 = vsel %vm297, %v279, 0
        %v305 = vsel %vm297, %v280, 0
        %307 = vmatprep.subr.mxu0 %v282
        %308 = vmatpush1.msra.mxu0 %v281
        %309 = vmatprep.subr.mxu0 %v284
        %310 = vmatpush1.msra.mxu0 %v283
        %311 = vmatprep.subr.mxu0 %v286
        %312 = vmatpush1.msra.mxu0 %v285
        %313 = vmatprep.subr.mxu0 %v288
        %314 = vmatpush1.msra.mxu0 %v287
        %315 = vmatprep.subr.mxu0 %v290
        %316 = vmatpush1.msra.mxu0 %v289
        %317 = vmatprep.subr.mxu0 %v292
        %318 = vmatpush1.msra.mxu0 %v291
        %319 = vmatprep.subr.mxu0 %v294
        %320 = vmatpush1.msra.mxu0 %v293
        %321 = vmatprep.subr.mxu0 %v296
        %322 = vmatpush1.msra.mxu0 %v295
        %323 = vmatprep.subr.mxu0 0.0
        %324 = vmatpush1.msra.mxu0 0.0
        %325 = vmatprep.subr.mxu0 0.0
        %326 = vmatpush1.msra.mxu0 0.0
        %327 = vmatprep.subr.mxu0 0.0
        %328 = vmatpush1.msra.mxu0 0.0
        %329 = vmatprep.subr.mxu0 0.0
        %330 = vmatpush1.msra.mxu0 0.0
        %331 = vmatprep.subr.mxu0 0.0
        %332 = vmatpush1.msra.mxu0 0.0
        %333 = vmatprep.subr.mxu0 0.0
        %334 = vmatpush1.msra.mxu0 0.0
        %335 = vmatprep.subr.mxu0 0.0
        %336 = vmatpush1.msra.mxu0 0.0
        %337 = vmatprep.subr.mxu0 0.0
        %338 = vmatpush1.msra.mxu0 0.0
        %339 = vmatprep.subr.mxu0 0.0
        %340 = vmatpush1.msra.mxu0 0.0
        %341 = vmatprep.subr.mxu0 0.0
        %342 = vmatpush1.msra.mxu0 0.0
        %343 = vmatprep.subr.mxu0 0.0
        %344 = vmatpush1.msra.mxu0 0.0
        %345 = vmatprep.subr.mxu0 0.0
        %346 = vmatpush1.msra.mxu0 0.0
        %347 = vmatprep.subr.mxu0 0.0
        %348 = vmatpush1.msra.mxu0 0.0
        %349 = vmatprep.subr.mxu0 0.0
        %350 = vmatpush1.msra.mxu0 0.0
        %351 = vmatprep.subr.mxu0 0.0
        %352 = vmatpush1.msra.mxu0 0.0
        %353 = vmatprep.subr.mxu0 0.0
        %354 = vmatpush1.msra.mxu0 0.0
        %355 = vmatprep.subr.mxu0 0.0
        %356 = vmatpush1.msra.mxu0 0.0
        %357 = vmatprep.subr.mxu0 0.0
        %358 = vmatpush1.msra.mxu0 0.0
        %359 = vmatprep.subr.mxu0 0.0
        %360 = vmatpush1.msra.mxu0 0.0
        %361 = vmatprep.subr.mxu0 0.0
        %362 = vmatpush1.msra.mxu0 0.0
        %363 = vmatprep.subr.mxu0 0.0
        %364 = vmatpush1.msra.mxu0 0.0
        %365 = vmatprep.subr.mxu0 0.0
        %366 = vmatpush1.msra.mxu0 0.0
        %367 = vmatprep.subr.mxu0 0.0
        %368 = vmatpush1.msra.mxu0 0.0
        %369 = vmatprep.subr.mxu0 0.0
        %370 = vmatpush1.msra.mxu0 0.0
        %371 = vmatprep.mubr.f32.mxu0 0.0
        %372 = vmatmul.mubr.f32.gmra.mrb[0].mxu0 %v299
        %v373 = vpop.f32.mrb[0].mxu0
        %v374 = vadd.f32 0.0, %v373
        %v375 = vpop.f32.mrb[0].mxu0
        %v376 = vadd.f32 0.0, %v375
        %377 = vmatprep.mubr.f32.mxu0 0.0
        %378 = vmatmul.mubr.f32.gmra.mrb[0].mxu0 %v302
        %v379 = vpop.f32.mrb[0].mxu0
        %v380 = vadd.f32 0.0, %v379
        %v381 = vpop.f32.mrb[0].mxu0
        %v382 = vadd.f32 0.0, %v381
        %383 = vmatprep.mubr.f32.mxu0 0.0
        %384 = vmatmul.mubr.f32.gmra.mrb[0].mxu0 %v305
        %v385 = vpop.f32.mrb[0].mxu0
        %v386 = vadd.f32 0.0, %v385
        %v387 = vpop.f32.mrb[0].mxu0
        %v388 = vadd.f32 0.0, %v387
        %389 = vdwg.mxu0
        %v390 = vmul.f32 %v374, 0.5
        %v391 = vmul.f32 %v380, 0.5
        %v392 = vmul.f32 %v386, 0.5
        %v393 = vmul.f32 %v374, 0.044715
        %v394 = vmul.f32 %v380, 0.044715
        %v395 = vmul.f32 %v386, 0.044715
        %v396 = vmul.f32 %v393, %v374
        %v397 = vmul.f32 %v394, %v380
        %v398 = vmul.f32 %v395, %v386
        %v399 = vmul.f32 %v396, %v374
        %v400 = vmul.f32 %v397, %v380
        %v401 = vmul.f32 %v398, %v386
        %v402 = vadd.f32 %v374, %v399
        %v403 = vadd.f32 %v380, %v400
        %v404 = vadd.f32 %v386, %v401
        %v405 = vmul.f32 %v402, 0.7978845
        %v406 = vmul.f32 %v403, 0.7978845
        %v407 = vmul.f32 %v404, 0.7978845
        %v408 = vtanh.pop %v405
        %v409 = vtanh.pop %v406
        %v410 = vtanh.pop %v407
        %v411 = vadd.f32 %v408, 1.0
        %v412 = vadd.f32 %v409, 1.0
        %v413 = vadd.f32 %v410, 1.0
        %v414 = vmul.f32 %v390, %v411
        %v415 = vmul.f32 %v391, %v412
        %v416 = vmul.f32 %v392, %v413
        %v417 = vmul.f32 %v414, %v376
        %v418 = vmul.f32 %v415, %v382
        %v419 = vmul.f32 %v416, %v388
        %v420 = vld [vmem:[#allocation2] sm:$0xff]
        %v421 = vld [vmem:[#allocation2 + $0x8] sm:$0xff]
        %v422 = vld [vmem:[#allocation2 + $0x10] sm:$0xff]
        %v423 = vld [vmem:[%s267] sm:$0xff]
        %v424 = vld [vmem:[%s267 + $0x8] sm:$0xff]
        %v425 = vld [vmem:[%s267 + $0x10] sm:$0xff]
        %v426 = vld [vmem:[%s267 + $0x18] sm:$0xff]
        %v427 = vld [vmem:[%s267 + $0x20] sm:$0xff]
        %v428 = vld [vmem:[%s267 + $0x28] sm:$0xff]
        %v429 = vld [vmem:[%s267 + $0x30] sm:$0xff]
        %v430 = vld [vmem:[%s267 + $0x38] sm:$0xff]
        %v431 = vld [vmem:[%s267 + $0x40] sm:$0xff]
        %v432 = vld [vmem:[%s267 + $0x48] sm:$0xff]
        %v433 = vld [vmem:[%s267 + $0x50] sm:$0xff]
        %v434 = vld [vmem:[%s267 + $0x58] sm:$0xff]
        %v435 = vld [vmem:[%s267 + $0x60] sm:$0xff]
        %v436 = vld [vmem:[%s267 + $0x68] sm:$0xff]
        %v437 = vld [vmem:[%s267 + $0x70] sm:$0xff]
        %v438 = vld [vmem:[%s267 + $0x78] sm:$0xff]
        %439 = vmatprep.subr.mxu0 0.0
        %440 = vmatpush1.msra.mxu0 %v423
        %441 = vmatprep.subr.mxu0 0.0
        %442 = vmatpush1.msra.mxu0 %v424
        %443 = vmatprep.subr.mxu0 0.0
        %444 = vmatpush1.msra.mxu0 %v425
        %445 = vmatprep.subr.mxu0 0.0
        %446 = vmatpush1.msra.mxu0 %v426
        %447 = vmatprep.subr.mxu0 0.0
        %448 = vmatpush1.msra.mxu0 %v427
        %449 = vmatprep.subr.mxu0 0.0
        %450 = vmatpush1.msra.mxu0 %v428
        %451 = vmatprep.subr.mxu0 0.0
        %452 = vmatpush1.msra.mxu0 %v429
        %453 = vmatprep.subr.mxu0 0.0
        %454 = vmatpush1.msra.mxu0 %v430
        %455 = vmatprep.subr.mxu0 0.0
        %456 = vmatpush1.msra.mxu0 %v431
        %457 = vmatprep.subr.mxu0 0.0
        %458 = vmatpush1.msra.mxu0 %v432
        %459 = vmatprep.subr.mxu0 0.0
        %460 = vmatpush1.msra.mxu0 %v433
        %461 = vmatprep.subr.mxu0 0.0
        %462 = vmatpush1.msra.mxu0 %v434
        %463 = vmatprep.subr.mxu0 0.0
        %464 = vmatpush1.msra.mxu0 %v435
        %465 = vmatprep.subr.mxu0 0.0
        %466 = vmatpush1.msra.mxu0 %v436
        %467 = vmatprep.subr.mxu0 0.0
        %468 = vmatpush1.msra.mxu0 %v437
        %469 = vmatprep.subr.mxu0 0.0
        %470 = vmatpush1.msra.mxu0 %v438
        %471 = vmatprep.subr.mxu0 0.0
        %472 = vmatpush1.msra.mxu0 0.0
        %473 = vmatprep.subr.mxu0 0.0
        %474 = vmatpush1.msra.mxu0 0.0
        %475 = vmatprep.subr.mxu0 0.0
        %476 = vmatpush1.msra.mxu0 0.0
        %477 = vmatprep.subr.mxu0 0.0
        %478 = vmatpush1.msra.mxu0 0.0
        %479 = vmatprep.subr.mxu0 0.0
        %480 = vmatpush1.msra.mxu0 0.0
        %481 = vmatprep.subr.mxu0 0.0
        %482 = vmatpush1.msra.mxu0 0.0
        %483 = vmatprep.subr.mxu0 0.0
        %484 = vmatpush1.msra.mxu0 0.0
        %485 = vmatprep.subr.mxu0 0.0
        %486 = vmatpush1.msra.mxu0 0.0
        %487 = vmatprep.subr.mxu0 0.0
        %488 = vmatpush1.msra.mxu0 0.0
        %489 = vmatprep.subr.mxu0 0.0
        %490 = vmatpush1.msra.mxu0 0.0
        %491 = vmatprep.subr.mxu0 0.0
        %492 = vmatpush1.msra.mxu0 0.0
        %493 = vmatprep.subr.mxu0 0.0
        %494 = vmatpush1.msra.mxu0 0.0
        %495 = vmatprep.subr.mxu0 0.0
        %496 = vmatpush1.msra.mxu0 0.0
        %497 = vmatprep.subr.mxu0 0.0
        %498 = vmatpush1.msra.mxu0 0.0
        %499 = vmatprep.subr.mxu0 0.0
        %500 = vmatpush1.msra.mxu0 0.0
        %501 = vmatprep.subr.mxu0 0.0
        %502 = vmatpush1.msra.mxu0 0.0
        %503 = vmatprep.mubr.f32.mxu0 0.0
        %504 = vmatmul.mubr.f32.gmra.mrb[0].mxu0 %v417
        %v505 = vpop.f32.mrb[0].mxu0
        %v506 = vadd.f32 0.0, %v505
        %v507 = vpop.f32.mrb[0].mxu0
        %508 = vmatprep.mubr.f32.mxu0 0.0
        %509 = vmatmul.mubr.f32.gmra.mrb[0].mxu0 %v418
        %v510 = vpop.f32.mrb[0].mxu0
        %v511 = vadd.f32 0.0, %v510
        %v512 = vpop.f32.mrb[0].mxu0
        %513 = vmatprep.mubr.f32.mxu0 0.0
        %514 = vmatmul.mubr.f32.gmra.mrb[0].mxu0 %v419
        %v515 = vpop.f32.mrb[0].mxu0
        %v516 = vadd.f32 0.0, %v515
        %v517 = vpop.f32.mrb[0].mxu0
        %518 = vdwg.mxu0
        %v519 = vadd.f32 %v420, %v506
        %v520 = vadd.f32 %v421, %v511
        %v521 = vadd.f32 %v422, %v516
        %522 = vst.msk [vmem:[#allocation2] sm:$0xff] %vm297, %v519
        %523 = vst.msk [vmem:[#allocation2 + $0x8] sm:$0xff] %vm297, %v520
        %524 = vst.msk [vmem:[#allocation2 + $0x10] sm:$0xff] %vm297, %v521
        %p525 = scmp.eq.s32.totalorder %s20, 1
        // Predicated region
        $region60: #{tpu_custom_call.1} parent=50 // pred_check
          %p526 = pneg %p525
        $region61: #{tpu_custom_call.1} parent=50 // pred_check_branch
          %528 = sbr.rel (%p526) target = $region63
        $region62: #{tpu_custom_call.1} parent=50 // pred_region
          %v529 = vld [vmem:[#allocation2] sm:$0xff]
          %v530 = vld [vmem:[#allocation2 + $0x8] sm:$0xff]
          %v531 = vld [vmem:[#allocation2 + $0x10] sm:$0xff]
          %532 = vst.msk [vmem:[#allocation4] sm:$0xff] %vm297, %v529
          %533 = vst.msk [vmem:[#allocation4 + $0x8] sm:$0xff] %vm297, %v530
          %534 = vst.msk [vmem:[#allocation4 + $0x10] sm:$0xff] %vm297, %v531
        $region63: #{tpu_custom_call.1} parent=50 // pred_fallthru
          _
        // Predicated region
        $region64: #{tpu_custom_call.1} parent=50 // pred_check
          %p535 = pneg %p123
        $region65: #{tpu_custom_call.1} parent=50 // pred_check_branch
          %537 = sbr.rel (%p535) target = $region67
        $region66: #{tpu_custom_call.1} parent=50 // pred_region
          %s538 = smul.u32 3, %s19
          %s540 = ssub.s32 384, 384
          %541 = vsyncadd [#allocation5], %s540
          %s542 = smul.addr %s538, 128
          %s543 = scalar_lea.hbm %s3, %s542
          %s544 = sshll.u32 [#allocation4], 4
          %s545 = int_to_ptr.vmem [resolvable:$true] %s544
          %550 = dma.vmem_to_hbm [thread:$0]  %s545, 384, %s543, [#allocation5], 128, 128, 8
        $region67: #{tpu_custom_call.1} parent=50 // pred_fallthru
          _
        // Predicated region
        $region68: #{tpu_custom_call.1} parent=50 // pred_check
          %p551 = pneg %p123
        $region69: #{tpu_custom_call.1} parent=50 // pred_check_branch
          %553 = sbr.rel (%p551) target = $region71
        $region70: #{tpu_custom_call.1} parent=50 // pred_region
          %554 = dma.done [#allocation5], 384
        $region71: #{tpu_custom_call.1} parent=50 // pred_fallthru
          _
      $region51: #{tpu_custom_call.1} parent=5 // pred_fallthru
        _
      %p555 = scmp.le.s32.totalorder 2, %s10
      // Predicated region
      $region72: #{tpu_custom_call.1} parent=5 // pred_check
        %p556 = pneg %p555
      $region73: #{tpu_custom_call.1} parent=5 // pred_check_branch
        %558 = sbr.rel (%p556) target = $region75
      $region74: #{tpu_custom_call.1} parent=5 // pred_region
        %s559 = ssub.s32 %s10, 2
      $region75: #{tpu_custom_call.1} parent=5 // pred_fallthru
        _
    $region6: #{tpu_custom_call.1} parent=1 // loop_footer
      %s14 = sadd.s32 1, %s10
    $region7: #{tpu_custom_call.1} parent=1 // loop_footer_branch
      %9 = sbr.rel target = $region3
    $region8: #{tpu_custom_call.1} parent=1 // loop_exit
      _
    %560 = vsyncpa [#allocation5], 1
    %s561 = scalar_lea.sflag [#allocation5], 1
    %562 = vsyncpa %s561, 1

</llo_original>
